<compile_context>
chip_gen: v6e
topology: v6e:2x2x1
jax: 0.10.0
libtpu: 0.0.40
codegen_flags: <defaults>
</compile_context>

<pallas_src>
import functools

import jax
import jax.numpy as jnp
from jax.experimental import pallas as pl
from jax.experimental.pallas import tpu as pltpu


# ----------------------------- Pallas kernel --------------------------------
def _conv_tanh_abs_kernel(x_ref, t_ref, b_ref, o_ref):
    # x_ref: (B*OH, K)       bf16 height-im2col rows for B images
    # t_ref: (K, OW*OC)      bf16 merged banded (width-Toeplitz) conv weight
    # b_ref: (1, OW*OC)      f32 bias tiled across OW
    # o_ref: (B*OH, OW*OC)   lane-dense output slab (contiguous NHWC rows)
    acc = jnp.dot(x_ref[...], t_ref[...], preferred_element_type=jnp.float32)
    acc = acc + b_ref[...]                        # broadcast (1, OW*OC), f32
    o_ref[...] = jnp.abs(jnp.tanh(acc)).astype(o_ref.dtype)


# --------------------------- weight preprocessing ----------------------------
def _banded_weight(weight, Wp, OW):
    """(OC, C, KH, KW) conv weight -> banded (KH, Wp*C, OW*OC) matrices.

    T[kh][w*C + c, ow*OC + oc] = weight[oc, c, kh, w - ow] if 0 <= w-ow < KW
    else 0, so that x_row(Wp*C) @ T[kh] performs the width dim of the conv.
    Only KW*C of each Wp*C-row band is nonzero -> some structural-zero MXU
    work, acceptable at these sizes (see OW-halo TODO above for scaling).
    """
    OC, C, KH, KW = weight.shape
    w_t = jnp.transpose(weight, (2, 3, 1, 0))            # (KH, KW, C, OC)
    w_idx = jnp.arange(Wp)[:, None]                      # (Wp, 1)
    ow_idx = jnp.arange(OW)[None, :]                     # (1, OW)
    kw = w_idx - ow_idx                                  # (Wp, OW)
    valid = (kw >= 0) & (kw < KW)
    kw_c = jnp.clip(kw, 0, KW - 1)
    gath = w_t[:, kw_c]                                  # (KH, Wp, OW, C, OC)
    gath = jnp.where(valid[None, :, :, None, None], gath, 0.0)
    t = jnp.transpose(gath, (0, 1, 3, 2, 4))             # (KH, Wp, C, OW, OC)
    return t.reshape(KH, Wp * C, OW * OC)


def prepare_conv_tanh_abs_params(weight, bias, H, W, padding=0,
                                 compute_dtype=jnp.bfloat16):
    """One-time (per weight set & spatial size) prep, hoisted out of the
    per-call path: merged banded weight (KH*Wp*C, OW*OC) in bf16 and the
    OW-tiled bias row in f32."""
    OC, C, KH, KW = weight.shape
    Hp, Wp = H + 2 * padding, W + 2 * padding
    OH, OW = Hp - KH + 1, Wp - KW + 1
    del OH  # not needed here
    t = _banded_weight(weight, Wp, OW)                    # (KH, Wp*C, OW*OC)
    t2 = t.reshape(KH * Wp * C, OW * OC).astype(compute_dtype)
    b_row = jnp.tile(bias, OW).reshape(1, OW * OC).astype(jnp.float32)
    return t2, b_row


# ------------------------------ JAX wrappers ---------------------------------
def _pick_batch_block(N, OH, max_block=8, min_steps=4):
    """Largest batch block B (<= max_block) that keeps the M block
    sublane-aligned and leaves >= min_steps grid steps (pipelining /
    megacore work).  Falls back to small/full blocks when nothing fits."""
    candidates = [b for b in range(1, min(N, max_block) + 1)
                  if N % b == 0 and ((b * OH) % 8 == 0 or b == N)]
    if not candidates:
        return N                                 # full-batch block, always legal
    good = [b for b in candidates if N // b >= min_steps]
    return max(good) if good else min(candidates)


@functools.partial(
    jax.jit,
    static_argnames=("KH", "padding", "out_channels", "batch_block",
                     "out_dtype"))
def conv_tanh_abs_nhwc(x_nhwc, t2, b_row, *, KH, padding, out_channels,
                       batch_block=None, out_dtype=jnp.float32):
    """NHWC forward: abs(tanh(conv2d(x) + b)), with prepared params t2/b_row.

    out_dtype can be set to bf16 if the downstream MaxPool accepts it
    (values are in [0, 1]); kept f32 here for the parity check.
    """
    N, H, W, C = x_nhwc.shape
    p = padding
    Hp, Wp = H + 2 * p, W + 2 * p
    OH = Hp - KH + 1
    K, OWOC = t2.shape
    OC = out_channels
    OW = OWOC // OC
    assert K == KH * Wp * C, (K, KH, Wp, C)
    assert OWOC == OW * OC, (OWOC, OW, OC)

    # Height-only im2col in bf16 (cheap: KH copies of a few-KB/image input).
    x = x_nhwc.astype(t2.dtype)
    if p:
        x = jnp.pad(x, ((0, 0), (p, p), (p, p), (0, 0)))
    xcol = jnp.stack([x[:, kh:kh + OH] for kh in range(KH)], axis=2)
    xcol = xcol.reshape(N * OH, K)      # rows: (n, oh); cols: (kh, w, c)

    B = batch_block if batch_block is not None else _pick_batch_block(N, OH)
    assert N % B == 0, (N, B)
    m_blk = B * OH

    op_bytes = jnp.dtype(t2.dtype).itemsize
    cost = pl.CostEstimate(
        # NOTE: includes the ~KW/Wp structural-zero work of the banded weight.
        flops=2 * (N * OH) * K * OWOC,
        transcendentals=N * OH * OWOC,
        bytes_accessed=(N * OH * K + K * OWOC) * op_bytes + OWOC * 4
        + N * OH * OWOC * jnp.dtype(out_dtype).itemsize,
    )

    out = pl.pallas_call(
        _conv_tanh_abs_kernel,
        out_shape=jax.ShapeDtypeStruct((N * OH, OWOC), out_dtype),
        grid=(N // B,),
        in_specs=[
            pl.BlockSpec((m_blk, K), lambda n: (n, 0)),    # B images of im2col
            pl.BlockSpec((K, OWOC), lambda n: (0, 0)),     # resident weight
            pl.BlockSpec((1, OWOC), lambda n: (0, 0)),     # resident bias row
        ],
        out_specs=pl.BlockSpec((m_blk, OWOC), lambda n: (n, 0)),
        compiler_params=pltpu.CompilerParams(
            dimension_semantics=("parallel",)),
        cost_estimate=cost,
    )(xcol, t2, b_row)

    return out.reshape(N, OH, OW, OC)    # free metadata reshape


def conv_tanh_abs(x_nchw, weight, bias, padding=0):
    """NCHW convenience adapter matching the PyTorch module's interface.
    For real use, hoist prepare_conv_tanh_abs_params and stay NHWC."""
    N, C, H, W = x_nchw.shape
    OC, _, KH, KW = weight.shape
    t2, b_row = prepare_conv_tanh_abs_params(weight, bias, H, W, padding)
    y = conv_tanh_abs_nhwc(jnp.transpose(x_nchw, (0, 2, 3, 1)), t2, b_row,
                           KH=KH, padding=padding, out_channels=OC)
    return jnp.transpose(y, (0, 3, 1, 2))


# --------------------------------- main --------------------------------------
if __name__ == "__main__":
    key = jax.random.PRNGKey(0)
    k_x, k_w, k_b = jax.random.split(key, 3)

    # LNet's first ConvTanhAbs block: Conv2d(3 -> 32, k=5, padding=2).
    # Batch 8 so batch folding (B=2 -> 4 grid steps, M block = 32) kicks in.
    N, C_in, H, W = 8, 3, 16, 16
    OC, KH, KW, PAD = 32, 5, 5, 2

    x = jax.random.normal(k_x, (N, C_in, H, W), dtype=jnp.float32)
    # LNet conv init: normal(0, sqrt(2 / (k*k*out_channels))).
    std = (2.0 / (KH * KW * OC)) ** 0.5
    weight = std * jax.random.normal(k_w, (OC, C_in, KH, KW), dtype=jnp.float32)
    fan_in = C_in * KH * KW
    bound = 1.0 / (fan_in ** 0.5)
    bias = jax.random.uniform(k_b, (OC,), minval=-bound, maxval=bound,
                              dtype=jnp.float32)

    # One-time weight prep (hoisted out of the per-call / benchmark path).
    t2, b_row = prepare_conv_tanh_abs_params(weight, bias, H, W, padding=PAD)

    # Hot path: NHWC pallas_call with prepared params (no layout adapters).
    x_nhwc = jnp.transpose(x, (0, 2, 3, 1))
    y_nhwc = conv_tanh_abs_nhwc(x_nhwc, t2, b_row, KH=KH, padding=PAD,
                                out_channels=OC)
    y_nhwc = jax.block_until_ready(y_nhwc)
    out = jnp.transpose(y_nhwc, (0, 3, 1, 2))        # NCHW only for the check

    # Reference 1: exact kernel math — same bf16-rounded operands, f32 accum.
    xb = x.astype(jnp.bfloat16).astype(jnp.float32)
    wb = weight.astype(jnp.bfloat16).astype(jnp.float32)
    ref_conv_b = jax.lax.conv_general_dilated(
        xb, wb, window_strides=(1, 1), padding=[(PAD, PAD), (PAD, PAD)],
        dimension_numbers=("NCHW", "OIHW", "NCHW"),
        precision=jax.lax.Precision.HIGHEST)
    ref_b = jnp.abs(jnp.tanh(ref_conv_b + bias.reshape(1, OC, 1, 1)))

    # Reference 2: the PyTorch module's f32 semantics (bf16 operand rounding
    # is the only deviation, so a looser tolerance applies).
    ref_conv = jax.lax.conv_general_dilated(
        x, weight, window_strides=(1, 1), padding=[(PAD, PAD), (PAD, PAD)],
        dimension_numbers=("NCHW", "OIHW", "NCHW"),
        precision=jax.lax.Precision.HIGHEST)
    ref = jnp.abs(jnp.tanh(ref_conv + bias.reshape(1, OC, 1, 1)))

    assert out.shape == (N, OC, H, W), out.shape
    assert jnp.allclose(out, ref_b, atol=1e-4, rtol=1e-4), float(
        jnp.max(jnp.abs(out - ref_b)))
    assert jnp.allclose(out, ref, atol=2e-2, rtol=2e-2), float(
        jnp.max(jnp.abs(out - ref)))

    print("KERNEL_OK")
</pallas_src>

<mosaic_0001>
module attributes {stable_mosaic.version = 11 : i64} {
  func.func @_conv_tanh_abs_kernel(%arg0: i32, %arg1: memref<32x300xbf16, #tpu.memory_space<vmem>>, %arg2: memref<300x512xbf16, #tpu.memory_space<vmem>>, %arg3: memref<1x512xf32, #tpu.memory_space<vmem>>, %arg4: memref<32x512xf32, #tpu.memory_space<vmem>>) attributes {dimension_semantics = [#tpu.dimension_semantics<parallel>], iteration_bounds = array<i64: 4>, scalar_prefetch = 0 : i64, scratch_operands = 0 : i64, tpu.core_type = #tpu.core_type<tc>, window_params = [{transform_indices = @transform_0, window_bounds = array<i64: 32, 300>}, {pipeline_mode = #tpu.pipeline_mode<synchronous>, transform_indices = @transform_1, window_bounds = array<i64: 300, 512>}, {pipeline_mode = #tpu.pipeline_mode<synchronous>, transform_indices = @transform_2, window_bounds = array<i64: 1, 512>}, {transform_indices = @transform_3, window_bounds = array<i64: 32, 512>}]} {
    %c0 = arith.constant 0 : index
    %c0_0 = arith.constant 0 : index
    %0 = vector.load %arg1[%c0, %c0_0] : memref<32x300xbf16, #tpu.memory_space<vmem>>, vector<32x300xbf16>
    %c0_1 = arith.constant 0 : index
    %c0_2 = arith.constant 0 : index
    %1 = vector.load %arg2[%c0_1, %c0_2] : memref<300x512xbf16, #tpu.memory_space<vmem>>, vector<300x512xbf16>
    %cst = arith.constant dense<0.000000e+00> : vector<32x512xf32>
    %2 = tpu.matmul %0, %1, %cst {dimension_numbers = #tpu.dot_dimension_numbers<[1], [0], [0], [1], [0, 0, 1, 1], [], []>} : vector<32x300xbf16>, vector<300x512xbf16>, vector<32x512xf32> -> vector<32x512xf32>
    %c0_3 = arith.constant 0 : index
    %c0_4 = arith.constant 0 : index
    %3 = vector.load %arg3[%c0_3, %c0_4] : memref<1x512xf32, #tpu.memory_space<vmem>>, vector<1x512xf32>
    %4 = vector.broadcast %3 : vector<1x512xf32> to vector<32x512xf32>
    %5 = arith.addf %2, %4 : vector<32x512xf32>
    %6 = math.tanh %5 : vector<32x512xf32>
    %7 = math.absf %6 : vector<32x512xf32>
    %c0_5 = arith.constant 0 : index
    %c0_6 = arith.constant 0 : index
    %8 = vector.load %arg4[%c0_5, %c0_6] : memref<32x512xf32, #tpu.memory_space<vmem>>, vector<32x512xf32>
    tpu.vector_store %arg4[%c0_5, %c0_6], %7 {strides = array<i32>} : memref<32x512xf32, #tpu.memory_space<vmem>>, vector<32x512xf32>,
    return
  }
  func.func @transform_0(%arg0: i32) -> (i32, i32) {
    %c0_i32 = arith.constant 0 : i32
    %c0_i32_0 = arith.constant 0 : i32
    return %arg0, %c0_i32 : i32, i32
  }
  func.func @transform_1(%arg0: i32) -> (i32, i32) {
    %c0_i32 = arith.constant 0 : i32
    %c0_i32_0 = arith.constant 0 : i32
    %c0_i32_1 = arith.constant 0 : i32
    return %c0_i32, %c0_i32_0 : i32, i32
  }
  func.func @transform_2(%arg0: i32) -> (i32, i32) {
    %c0_i32 = arith.constant 0 : i32
    %c0_i32_0 = arith.constant 0 : i32
    %c0_i32_1 = arith.constant 0 : i32
    return %c0_i32, %c0_i32_0 : i32, i32
  }
  func.func @transform_3(%arg0: i32) -> (i32, i32) {
    %c0_i32 = arith.constant 0 : i32
    %c0_i32_0 = arith.constant 0 : i32
    return %arg0, %c0_i32 : i32, i32
  }
}

</mosaic_0001>

<llo_original>
// kernel: conv_tanh_abs_nhwc.1
$region0: #{conv_tanh_abs_nhwc.1}
  #allocation0 [shape = 'u32[]', space=smem, size = 0x4, offset = 0x4, fixed_abs, tag = 'smem constant byte address 0x4 - core index']
  #allocation1 [shape = 'u32[144,128]{1,0:T(1,128)}', space=vmem, size = 0x12000, scoped, tag = 'internal scratch']
  %s0 = inlined_call_operand.vmem [shape: bf16[128,300], index: 0, kind: input, shape index: {}]
  %s1 = inlined_call_operand.vmem [shape: bf16[300,512], index: 1, kind: input, shape index: {}]
  %s2 = inlined_call_operand.vmem [shape: f32[1,512], index: 2, kind: input, shape index: {}]
  %s3 = inlined_call_operand.vmem [shape: f32[128,512], index: 3, kind: output, shape index: {}]
  %s4 = sld [smem:[#allocation0]]
  $region45: #{conv_tanh_abs_nhwc.1} parent=0
    _
  %s6 = ssub.s32 1, %s4
  %s7 = scalar_select 0, %s6, %s4
  loop: start=0, step=1, limit=6
  $region2: #{conv_tanh_abs_nhwc.1} parent=0 // loop_pre_header
    _
  $region3: #{conv_tanh_abs_nhwc.1} parent=0 // loop_header
    %s9 = sphi 0, %s13
    %p10 = scmp.ge.s32.totalorder %s9, 6
    %s19 = sphi 0, %s21
    %s22 = sphi 0, %s19
    %s23 = sphi 0, %s22
    %s39 = sphi 0, %s23
    %s43 = sphi 0, %s43
    %s45 = sphi 0, %s43
    %s46 = sphi 0, %s45
    %s60 = sphi 0, %s46
    %s64 = sphi 0, %s64
    %s66 = sphi 0, %s64
    %s67 = sphi 0, %s66
    %s81 = sphi 0, %s67
    %s87 = sphi 0, %s89
    %s90 = sphi 0, %s87
    %s91 = sphi 0, %s90
    %s107 = sphi 0, %s91
  $region4: #{conv_tanh_abs_nhwc.1} parent=0 // loop_header_branch
    %12 = sbr.rel (%p10) target = $region8
  $region5: #{conv_tanh_abs_nhwc.1} parent=0 // loop_body
    %s14 = ssub.s32 %s9, 1
    %s15 = ssub.s32 %s9, 2
    %s16 = sadd.s32 %s9, 1
    %s17 = ssub.s32 %s9, %s16
    %p18 = scmp.eq.s32.totalorder %s17, 0
    %s20 = sadd.s32 %s19, 1
    %s21 = scalar_select %p18, %s19, %s20
    %p24 = pneg %p18
    %p25 = scmp.eq.s32.totalorder %s9, 3
    %p26 = por %p24, %p25
    %p27 = scmp.ne.s32.totalorder %s19, %s22
    %p28 = scmp.eq.s32.totalorder %s9, 0
    %p29 = por %p27, %p28
    %p30 = scmp.ne.s32.totalorder %s19, %s22
    %p31 = scmp.eq.s32.totalorder %s14, 3
    %p32 = por %p30, %p31
    %p33 = scmp.ne.s32.totalorder %s22, %s23
    %p34 = scmp.eq.s32.totalorder %s14, 0
    %p35 = por %p33, %p34
    %p36 = scmp.ne.s32.totalorder %s22, %s23
    %p37 = scmp.eq.s32.totalorder %s15, 3
    %p38 = por %p36, %p37
    %p40 = scmp.ne.s32.totalorder %s23, %s39
    %p41 = scmp.eq.s32.totalorder %s15, 0
    %p42 = por %p40, %p41
    %s44 = sadd.s32 %s43, 1
    %p47 = scmp.eq.s32.totalorder %s9, 3
    %p48 = scmp.ne.s32.totalorder %s43, %s45
    %p49 = scmp.eq.s32.totalorder %s9, 0
    %p50 = por %p48, %p49
    %p51 = scmp.ne.s32.totalorder %s43, %s45
    %p52 = scmp.eq.s32.totalorder %s14, 3
    %p53 = por %p51, %p52
    %p54 = scmp.ne.s32.totalorder %s45, %s46
    %p55 = scmp.eq.s32.totalorder %s14, 0
    %p56 = por %p54, %p55
    %p57 = scmp.ne.s32.totalorder %s45, %s46
    %p58 = scmp.eq.s32.totalorder %s15, 3
    %p59 = por %p57, %p58
    %p61 = scmp.ne.s32.totalorder %s46, %s60
    %p62 = scmp.eq.s32.totalorder %s15, 0
    %p63 = por %p61, %p62
    %s65 = sadd.s32 %s64, 1
    %p68 = scmp.eq.s32.totalorder %s9, 3
    %p69 = scmp.ne.s32.totalorder %s64, %s66
    %p70 = scmp.eq.s32.totalorder %s9, 0
    %p71 = por %p69, %p70
    %p72 = scmp.ne.s32.totalorder %s64, %s66
    %p73 = scmp.eq.s32.totalorder %s14, 3
    %p74 = por %p72, %p73
    %p75 = scmp.ne.s32.totalorder %s66, %s67
    %p76 = scmp.eq.s32.totalorder %s14, 0
    %p77 = por %p75, %p76
    %p78 = scmp.ne.s32.totalorder %s66, %s67
    %p79 = scmp.eq.s32.totalorder %s15, 3
    %p80 = por %p78, %p79
    %p82 = scmp.ne.s32.totalorder %s67, %s81
    %p83 = scmp.eq.s32.totalorder %s15, 0
    %p84 = por %p82, %p83
    %s85 = ssub.s32 %s9, %s16
    %p86 = scmp.eq.s32.totalorder %s85, 0
    %s88 = sadd.s32 %s87, 1
    %s89 = scalar_select %p86, %s87, %s88
    %p92 = pneg %p86
    %p93 = scmp.eq.s32.totalorder %s9, 3
    %p94 = por %p92, %p93
    %p95 = scmp.ne.s32.totalorder %s87, %s90
    %p96 = scmp.eq.s32.totalorder %s9, 0
    %p97 = por %p95, %p96
    %p98 = scmp.ne.s32.totalorder %s87, %s90
    %p99 = scmp.eq.s32.totalorder %s14, 3
    %p100 = por %p98, %p99
    %p101 = scmp.ne.s32.totalorder %s90, %s91
    %p102 = scmp.eq.s32.totalorder %s14, 0
    %p103 = por %p101, %p102
    %p104 = scmp.ne.s32.totalorder %s90, %s91
    %p105 = scmp.eq.s32.totalorder %s15, 3
    %p106 = por %p104, %p105
    %p108 = scmp.ne.s32.totalorder %s91, %s107
    %p109 = scmp.eq.s32.totalorder %s15, 0
    %p110 = por %p108, %p109
    %p111 = scmp.le.s32.totalorder 1, %s9
    %p112 = scmp.lt.s32.totalorder %s9, 5
    %p113 = pnand %p111, %p112
    %p114 = pneg %p113
    // Predicated region
    $region9: #{conv_tanh_abs_nhwc.1} parent=5 // pred_check
      _
    $region10: #{conv_tanh_abs_nhwc.1} parent=5 // pred_check_branch
      %116 = sbr.rel (%p113) target = $region12
    $region11: #{conv_tanh_abs_nhwc.1} parent=5 // pred_region
      %s117 = ssub.s32 %s9, 1
      // Predicated region
      $region13: #{conv_tanh_abs_nhwc.1} parent=11 // pred_check
        %p118 = pneg %p56
      $region14: #{conv_tanh_abs_nhwc.1} parent=11 // pred_check_branch
        %120 = sbr.rel (%p118) target = $region16
      $region15: #{conv_tanh_abs_nhwc.1} parent=11 // pred_region
        _
      $region16: #{conv_tanh_abs_nhwc.1} parent=11 // pred_fallthru
        _
      // Predicated region
      $region17: #{conv_tanh_abs_nhwc.1} parent=11 // pred_check
        %p121 = pneg %p77
      $region18: #{conv_tanh_abs_nhwc.1} parent=11 // pred_check_branch
        %123 = sbr.rel (%p121) target = $region20
      $region19: #{conv_tanh_abs_nhwc.1} parent=11 // pred_region
        _
      $region20: #{conv_tanh_abs_nhwc.1} parent=11 // pred_fallthru
        _
    $region12: #{conv_tanh_abs_nhwc.1} parent=5 // pred_fallthru
      _
    %p124 = scmp.lt.s32.totalorder %s9, 4
    // Predicated region
    $region21: #{conv_tanh_abs_nhwc.1} parent=5 // pred_check
      %p125 = pneg %p124
    $region22: #{conv_tanh_abs_nhwc.1} parent=5 // pred_check_branch
      %127 = sbr.rel (%p125) target = $region24
    $region23: #{conv_tanh_abs_nhwc.1} parent=5 // pred_region
      // Predicated region
      $region25: #{conv_tanh_abs_nhwc.1} parent=23 // pred_check
        %p128 = pneg %p29
      $region26: #{conv_tanh_abs_nhwc.1} parent=23 // pred_check_branch
        %130 = sbr.rel (%p128) target = $region28
      $region27: #{conv_tanh_abs_nhwc.1} parent=23 // pred_region
        %s131 = smul.u32 4, %s9
        %p132 = scmp.lt.s32.totalorder %s131, 15
        %s133 = scalar_select %p132, %s131, 15
        %s134 = smul.addr %s133, 3
        %s135 = smul.addr %s134, 4
        %s136 = scalar_lea.vmem %s0, %s135
        %s137 = smul.u32 4, %s9
      $region28: #{conv_tanh_abs_nhwc.1} parent=23 // pred_fallthru
        _
    $region24: #{conv_tanh_abs_nhwc.1} parent=5 // pred_fallthru
      _
    %p138 = scmp.le.s32.totalorder 1, %s9
    %p139 = scmp.lt.s32.totalorder %s9, 5
    %p140 = pnand %p138, %p139
    %p141 = pneg %p140
    // Predicated region
    $region29: #{conv_tanh_abs_nhwc.1} parent=5 // pred_check
      _
    $region30: #{conv_tanh_abs_nhwc.1} parent=5 // pred_check_branch
      %143 = sbr.rel (%p140) target = $region32
    $region31: #{conv_tanh_abs_nhwc.1} parent=5 // pred_region
      %s144 = ssub.s32 %s9, 1
      %s145 = smul.u32 4, %s14
      %p146 = scmp.lt.s32.totalorder %s145, 15
      %s147 = scalar_select %p146, %s145, 15
      %s148 = smul.addr %s147, 3
      %s149 = smul.addr %s148, 4
      %s150 = scalar_lea.vmem %s0, %s149
      %p151 = pneg %p35
      %p152 = pneg %p32
      %p153 = pneg %p56
      %p154 = pneg %p53
      %p155 = pneg %p77
      %p156 = pneg %p74
      %p157 = pneg %p103
      %p158 = pneg %p100
      %s159 = smul.u32 4, %s14
      %p160 = scmp.lt.s32.totalorder %s159, 15
      %s161 = scalar_select %p160, %s159, 15
      %s162 = smul.addr %s161, 4
      %s163 = smul.addr %s162, 8
      %s164 = scalar_lea.vmem %s3, %s163
      %s165 = smul.u32 4, %s14
      %p166 = scmp.lt.s32.totalorder %s165, 15
      %s167 = scalar_select %p166, %s165, 15
      %s168 = smul.addr %s167, 3
      %s169 = smul.addr %s168, 4
      %s170 = scalar_lea.vmem %s0, %s169
      %s171 = smul.u32 4, %s14
      %s172 = smul.u32 4, %s14
      %p173 = scmp.lt.s32.totalorder %s172, 15
      %s174 = scalar_select %p173, %s172, 15
      %s175 = smul.addr %s174, 4
      %s176 = smul.addr %s175, 8
      %s177 = scalar_lea.vmem %s3, %s176
      %s178 = smul.u32 4, %s14
      %v180 = vld [vmem:[%s170] sm:$0xff]
      %v181 = vld [vmem:[%s170 + $0x8] sm:$0xf]
      %v182 = vld [vmem:[%s170 + $0xc] sm:$0xff]
      %v183 = vld [vmem:[%s170 + $0x14] sm:$0xf]
      %v184 = vld [vmem:[%s170 + $0x18] sm:$0xff]
      %v185 = vld [vmem:[%s170 + $0x20] sm:$0xf]
      %v186 = vld [vmem:[%s170 + $0x24] sm:$0xff]
      %v187 = vld [vmem:[%s170 + $0x2c] sm:$0xf]
      %v188 = vld [vmem:[%s1] sm:$0xff]
      %v189 = vld [vmem:[%s1 + $0x8] sm:$0xff]
      %v190 = vld [vmem:[%s1 + $0x10] sm:$0xff]
      %v191 = vld [vmem:[%s1 + $0x18] sm:$0xff]
      %v192 = vld [vmem:[%s1 + $0x20] sm:$0xff]
      %v193 = vld [vmem:[%s1 + $0x28] sm:$0xff]
      %v194 = vld [vmem:[%s1 + $0x30] sm:$0xff]
      %v195 = vld [vmem:[%s1 + $0x38] sm:$0xff]
      %v196 = vld [vmem:[%s1 + $0x40] sm:$0xff]
      %v197 = vld [vmem:[%s1 + $0x48] sm:$0xff]
      %v198 = vld [vmem:[%s1 + $0x50] sm:$0xff]
      %v199 = vld [vmem:[%s1 + $0x58] sm:$0xff]
      %v200 = vld [vmem:[%s1 + $0x60] sm:$0xff]
      %v201 = vld [vmem:[%s1 + $0x68] sm:$0xff]
      %v202 = vld [vmem:[%s1 + $0x70] sm:$0xff]
      %v203 = vld [vmem:[%s1 + $0x78] sm:$0xff]
      %v204 = vld [vmem:[%s1 + $0x80] sm:$0xff]
      %v205 = vld [vmem:[%s1 + $0x88] sm:$0xff]
      %v206 = vld [vmem:[%s1 + $0x90] sm:$0xff]
      %v207 = vld [vmem:[%s1 + $0x98] sm:$0xff]
      %v208 = vld [vmem:[%s1 + $0xa0] sm:$0xff]
      %v209 = vld [vmem:[%s1 + $0xa8] sm:$0xff]
      %v210 = vld [vmem:[%s1 + $0xb0] sm:$0xff]
      %v211 = vld [vmem:[%s1 + $0xb8] sm:$0xff]
      %v212 = vld [vmem:[%s1 + $0xc0] sm:$0xff]
      %v213 = vld [vmem:[%s1 + $0xc8] sm:$0xff]
      %v214 = vld [vmem:[%s1 + $0xd0] sm:$0xff]
      %v215 = vld [vmem:[%s1 + $0xd8] sm:$0xff]
      %v216 = vld [vmem:[%s1 + $0xe0] sm:$0xff]
      %v217 = vld [vmem:[%s1 + $0xe8] sm:$0xff]
      %v218 = vld [vmem:[%s1 + $0xf0] sm:$0xff]
      %v219 = vld [vmem:[%s1 + $0xf8] sm:$0xff]
      %v220 = vld [vmem:[%s1 + $0x100] sm:$0xff]
      %v221 = vld [vmem:[%s1 + $0x108] sm:$0xff]
      %v222 = vld [vmem:[%s1 + $0x110] sm:$0xff]
      %v223 = vld [vmem:[%s1 + $0x118] sm:$0xff]
      %v224 = vld [vmem:[%s1 + $0x120] sm:$0xff]
      %v225 = vld [vmem:[%s1 + $0x128] sm:$0xff]
      %v226 = vld [vmem:[%s1 + $0x130] sm:$0xff]
      %v227 = vld [vmem:[%s1 + $0x138] sm:$0xff]
      %v228 = vld [vmem:[%s1 + $0x140] sm:$0xff]
      %v229 = vld [vmem:[%s1 + $0x148] sm:$0xff]
      %v230 = vld [vmem:[%s1 + $0x150] sm:$0xff]
      %v231 = vld [vmem:[%s1 + $0x158] sm:$0xff]
      %v232 = vld [vmem:[%s1 + $0x160] sm:$0xff]
      %v233 = vld [vmem:[%s1 + $0x168] sm:$0xff]
      %v234 = vld [vmem:[%s1 + $0x170] sm:$0xff]
      %v235 = vld [vmem:[%s1 + $0x178] sm:$0xff]
      %v236 = vld [vmem:[%s1 + $0x180] sm:$0xff]
      %v237 = vld [vmem:[%s1 + $0x188] sm:$0xff]
      %v238 = vld [vmem:[%s1 + $0x190] sm:$0xff]
      %v239 = vld [vmem:[%s1 + $0x198] sm:$0xff]
      %v240 = vld [vmem:[%s1 + $0x1a0] sm:$0xff]
      %v241 = vld [vmem:[%s1 + $0x1a8] sm:$0xff]
      %v242 = vld [vmem:[%s1 + $0x1b0] sm:$0xff]
      %v243 = vld [vmem:[%s1 + $0x1b8] sm:$0xff]
      %v244 = vld [vmem:[%s1 + $0x1c0] sm:$0xff]
      %v245 = vld [vmem:[%s1 + $0x1c8] sm:$0xff]
      %v246 = vld [vmem:[%s1 + $0x1d0] sm:$0xff]
      %v247 = vld [vmem:[%s1 + $0x1d8] sm:$0xff]
      %v248 = vld [vmem:[%s1 + $0x1e0] sm:$0xff]
      %v249 = vld [vmem:[%s1 + $0x1e8] sm:$0xff]
      %v250 = vld [vmem:[%s1 + $0x1f0] sm:$0xff]
      %v251 = vld [vmem:[%s1 + $0x1f8] sm:$0xff]
      %v252 = vld [vmem:[%s1 + $0x200] sm:$0xff]
      %v253 = vld [vmem:[%s1 + $0x208] sm:$0xff]
      %v254 = vld [vmem:[%s1 + $0x210] sm:$0xff]
      %v255 = vld [vmem:[%s1 + $0x218] sm:$0xff]
      %v256 = vld [vmem:[%s1 + $0x220] sm:$0xff]
      %v257 = vld [vmem:[%s1 + $0x228] sm:$0xff]
      %v258 = vld [vmem:[%s1 + $0x230] sm:$0xff]
      %v259 = vld [vmem:[%s1 + $0x238] sm:$0xff]
      %v260 = vld [vmem:[%s1 + $0x240] sm:$0xff]
      %v261 = vld [vmem:[%s1 + $0x248] sm:$0xff]
      %v262 = vld [vmem:[%s1 + $0x250] sm:$0x33]
      %v263 = vld [vmem:[%s1 + $0x258] sm:$0x33]
      %v264 = vld [vmem:[%s2] sm:$0xf]
      %v266 = vlaneseq
      %v267 = vshrl.u32 %v266, 7
      %v268 = vsub.s32 0, %v267
      %v269 = vrot.slane %v264, %v268
      %v270 = vlaneseq
      %v271 = vshrl.u32 %v270, 7
      %v272 = vsub.s32 1, %v271
      %v273 = vrot.slane %v264, %v272
      %v274 = vlaneseq
      %v275 = vshrl.u32 %v274, 7
      %v276 = vsub.s32 2, %v275
      %v277 = vrot.slane %v264, %v276
      %v278 = vlaneseq
      %v279 = vshrl.u32 %v278, 7
      %v280 = vsub.s32 3, %v279
      %v281 = vrot.slane %v264, %v280
      %v294 = vunpack.c.l.b16 %v180
      %v295 = vunpack.c.h.b16 %v180
      %v296 = vunpack.c.l.b16 %v181
      %v297 = vunpack.c.l.b16 %v182
      %v298 = vunpack.c.h.b16 %v182
      %v299 = vunpack.c.l.b16 %v183
      %v300 = vunpack.c.l.b16 %v184
      %v301 = vunpack.c.h.b16 %v184
      %v302 = vunpack.c.l.b16 %v185
      %v303 = vunpack.c.l.b16 %v186
      %v304 = vunpack.c.h.b16 %v186
      %v305 = vunpack.c.l.b16 %v187
      %v306 = vpack.c.b16 %v297, %v294
      %v307 = vpack.c.b16 %v298, %v295
      %v308 = vpack.c.b16 %v299, %v296
      %v309 = vpack.c.b16 %v303, %v300
      %v310 = vpack.c.b16 %v304, %v301
      %v311 = vpack.c.b16 %v305, %v302
      %v392 = vunpack.c.l.b16 %v188
      %v393 = vunpack.c.h.b16 %v188
      %v394 = vunpack.c.l.b16 %v189
      %v395 = vunpack.c.h.b16 %v189
      %v396 = vunpack.c.l.b16 %v190
      %v397 = vunpack.c.h.b16 %v190
      %v398 = vunpack.c.l.b16 %v191
      %v399 = vunpack.c.h.b16 %v191
      %v400 = vunpack.c.l.b16 %v192
      %v401 = vunpack.c.h.b16 %v192
      %v402 = vunpack.c.l.b16 %v193
      %v403 = vunpack.c.h.b16 %v193
      %v404 = vunpack.c.l.b16 %v194
      %v405 = vunpack.c.h.b16 %v194
      %v406 = vunpack.c.l.b16 %v195
      %v407 = vunpack.c.h.b16 %v195
      %v408 = vunpack.c.l.b16 %v196
      %v409 = vunpack.c.h.b16 %v196
      %v410 = vunpack.c.l.b16 %v197
      %v411 = vunpack.c.h.b16 %v197
      %v412 = vunpack.c.l.b16 %v198
      %v413 = vunpack.c.h.b16 %v198
      %v414 = vunpack.c.l.b16 %v199
      %v415 = vunpack.c.h.b16 %v199
      %v416 = vunpack.c.l.b16 %v200
      %v417 = vunpack.c.h.b16 %v200
      %v418 = vunpack.c.l.b16 %v201
      %v419 = vunpack.c.h.b16 %v201
      %v420 = vunpack.c.l.b16 %v202
      %v421 = vunpack.c.h.b16 %v202
      %v422 = vunpack.c.l.b16 %v203
      %v423 = vunpack.c.h.b16 %v203
      %v424 = vunpack.c.l.b16 %v204
      %v425 = vunpack.c.h.b16 %v204
      %v426 = vunpack.c.l.b16 %v205
      %v427 = vunpack.c.h.b16 %v205
      %v428 = vunpack.c.l.b16 %v206
      %v429 = vunpack.c.h.b16 %v206
      %v430 = vunpack.c.l.b16 %v207
      %v431 = vunpack.c.h.b16 %v207
      %v432 = vunpack.c.l.b16 %v208
      %v433 = vunpack.c.h.b16 %v208
      %v434 = vunpack.c.l.b16 %v209
      %v435 = vunpack.c.h.b16 %v209
      %v436 = vunpack.c.l.b16 %v210
      %v437 = vunpack.c.h.b16 %v210
      %v438 = vunpack.c.l.b16 %v211
      %v439 = vunpack.c.h.b16 %v211
      %v440 = vunpack.c.l.b16 %v212
      %v441 = vunpack.c.h.b16 %v212
      %v442 = vunpack.c.l.b16 %v213
      %v443 = vunpack.c.h.b16 %v213
      %v444 = vunpack.c.l.b16 %v214
      %v445 = vunpack.c.h.b16 %v214
      %v446 = vunpack.c.l.b16 %v215
      %v447 = vunpack.c.h.b16 %v215
      %v448 = vunpack.c.l.b16 %v216
      %v449 = vunpack.c.h.b16 %v216
      %v450 = vunpack.c.l.b16 %v217
      %v451 = vunpack.c.h.b16 %v217
      %v452 = vunpack.c.l.b16 %v218
      %v453 = vunpack.c.h.b16 %v218
      %v454 = vunpack.c.l.b16 %v219
      %v455 = vunpack.c.h.b16 %v219
      %v456 = vunpack.c.l.b16 %v220
      %v457 = vunpack.c.h.b16 %v220
      %v458 = vunpack.c.l.b16 %v221
      %v459 = vunpack.c.h.b16 %v221
      %v460 = vunpack.c.l.b16 %v222
      %v461 = vunpack.c.h.b16 %v222
      %v462 = vunpack.c.l.b16 %v223
      %v463 = vunpack.c.h.b16 %v223
      %v464 = vunpack.c.l.b16 %v224
      %v465 = vunpack.c.h.b16 %v224
      %v466 = vunpack.c.l.b16 %v225
      %v467 = vunpack.c.h.b16 %v225
      %v468 = vunpack.c.l.b16 %v226
      %v469 = vunpack.c.h.b16 %v226
      %v470 = vunpack.c.l.b16 %v227
      %v471 = vunpack.c.h.b16 %v227
      %v472 = vunpack.c.l.b16 %v228
      %v473 = vunpack.c.h.b16 %v228
      %v474 = vunpack.c.l.b16 %v229
      %v475 = vunpack.c.h.b16 %v229
      %v476 = vunpack.c.l.b16 %v230
      %v477 = vunpack.c.h.b16 %v230
      %v478 = vunpack.c.l.b16 %v231
      %v479 = vunpack.c.h.b16 %v231
      %v480 = vunpack.c.l.b16 %v232
      %v481 = vunpack.c.h.b16 %v232
      %v482 = vunpack.c.l.b16 %v233
      %v483 = vunpack.c.h.b16 %v233
      %v484 = vunpack.c.l.b16 %v234
      %v485 = vunpack.c.h.b16 %v234
      %v486 = vunpack.c.l.b16 %v235
      %v487 = vunpack.c.h.b16 %v235
      %v488 = vunpack.c.l.b16 %v236
      %v489 = vunpack.c.h.b16 %v236
      %v490 = vunpack.c.l.b16 %v237
      %v491 = vunpack.c.h.b16 %v237
      %v492 = vunpack.c.l.b16 %v238
      %v493 = vunpack.c.h.b16 %v238
      %v494 = vunpack.c.l.b16 %v239
      %v495 = vunpack.c.h.b16 %v239
      %v496 = vunpack.c.l.b16 %v240
      %v497 = vunpack.c.h.b16 %v240
      %v498 = vunpack.c.l.b16 %v241
      %v499 = vunpack.c.h.b16 %v241
      %v500 = vunpack.c.l.b16 %v242
      %v501 = vunpack.c.h.b16 %v242
      %v502 = vunpack.c.l.b16 %v243
      %v503 = vunpack.c.h.b16 %v243
      %v504 = vunpack.c.l.b16 %v244
      %v505 = vunpack.c.h.b16 %v244
      %v506 = vunpack.c.l.b16 %v245
      %v507 = vunpack.c.h.b16 %v245
      %v508 = vunpack.c.l.b16 %v246
      %v509 = vunpack.c.h.b16 %v246
      %v510 = vunpack.c.l.b16 %v247
      %v511 = vunpack.c.h.b16 %v247
      %v512 = vunpack.c.l.b16 %v248
      %v513 = vunpack.c.h.b16 %v248
      %v514 = vunpack.c.l.b16 %v249
      %v515 = vunpack.c.h.b16 %v249
      %v516 = vunpack.c.l.b16 %v250
      %v517 = vunpack.c.h.b16 %v250
      %v518 = vunpack.c.l.b16 %v251
      %v519 = vunpack.c.h.b16 %v251
      %v520 = vunpack.c.l.b16 %v252
      %v521 = vunpack.c.h.b16 %v252
      %v522 = vunpack.c.l.b16 %v253
      %v523 = vunpack.c.h.b16 %v253
      %v524 = vunpack.c.l.b16 %v254
      %v525 = vunpack.c.h.b16 %v254
      %v526 = vunpack.c.l.b16 %v255
      %v527 = vunpack.c.h.b16 %v255
      %v528 = vunpack.c.l.b16 %v256
      %v529 = vunpack.c.h.b16 %v256
      %v530 = vunpack.c.l.b16 %v257
      %v531 = vunpack.c.h.b16 %v257
      %v532 = vunpack.c.l.b16 %v258
      %v533 = vunpack.c.h.b16 %v258
      %v534 = vunpack.c.l.b16 %v259
      %v535 = vunpack.c.h.b16 %v259
      %v536 = vunpack.c.l.b16 %v260
      %v537 = vunpack.c.h.b16 %v260
      %v538 = vunpack.c.l.b16 %v261
      %v539 = vunpack.c.h.b16 %v261
      %v540 = vunpack.c.l.b16 %v262
      %v541 = vunpack.c.h.b16 %v262
      %v542 = vunpack.c.l.b16 %v263
      %v543 = vunpack.c.h.b16 %v263
      %v544 = vpack.c.b16 %v396, %v392
      %v545 = vpack.c.b16 %v397, %v393
      %v546 = vpack.c.b16 %v398, %v394
      %v547 = vpack.c.b16 %v399, %v395
      %v548 = vpack.c.b16 %v404, %v400
      %v549 = vpack.c.b16 %v405, %v401
      %v550 = vpack.c.b16 %v406, %v402
      %v551 = vpack.c.b16 %v407, %v403
      %v552 = vpack.c.b16 %v412, %v408
      %v553 = vpack.c.b16 %v413, %v409
      %v554 = vpack.c.b16 %v414, %v410
      %v555 = vpack.c.b16 %v415, %v411
      %v556 = vpack.c.b16 %v420, %v416
      %v557 = vpack.c.b16 %v421, %v417
      %v558 = vpack.c.b16 %v422, %v418
      %v559 = vpack.c.b16 %v423, %v419
      %v560 = vpack.c.b16 %v428, %v424
      %v561 = vpack.c.b16 %v429, %v425
      %v562 = vpack.c.b16 %v430, %v426
      %v563 = vpack.c.b16 %v431, %v427
      %v564 = vpack.c.b16 %v436, %v432
      %v565 = vpack.c.b16 %v437, %v433
      %v566 = vpack.c.b16 %v438, %v434
      %v567 = vpack.c.b16 %v439, %v435
      %v568 = vpack.c.b16 %v444, %v440
      %v569 = vpack.c.b16 %v445, %v441
      %v570 = vpack.c.b16 %v446, %v442
      %v571 = vpack.c.b16 %v447, %v443
      %v572 = vpack.c.b16 %v452, %v448
      %v573 = vpack.c.b16 %v453, %v449
      %v574 = vpack.c.b16 %v454, %v450
      %v575 = vpack.c.b16 %v455, %v451
      %v576 = vpack.c.b16 %v460, %v456
      %v577 = vpack.c.b16 %v461, %v457
      %v578 = vpack.c.b16 %v462, %v458
      %v579 = vpack.c.b16 %v463, %v459
      %v580 = vpack.c.b16 %v468, %v464
      %v581 = vpack.c.b16 %v469, %v465
      %v582 = vpack.c.b16 %v470, %v466
      %v583 = vpack.c.b16 %v471, %v467
      %v584 = vpack.c.b16 %v476, %v472
      %v585 = vpack.c.b16 %v477, %v473
      %v586 = vpack.c.b16 %v478, %v474
      %v587 = vpack.c.b16 %v479, %v475
      %v588 = vpack.c.b16 %v484, %v480
      %v589 = vpack.c.b16 %v485, %v481
      %v590 = vpack.c.b16 %v486, %v482
      %v591 = vpack.c.b16 %v487, %v483
      %v592 = vpack.c.b16 %v492, %v488
      %v593 = vpack.c.b16 %v493, %v489
      %v594 = vpack.c.b16 %v494, %v490
      %v595 = vpack.c.b16 %v495, %v491
      %v596 = vpack.c.b16 %v500, %v496
      %v597 = vpack.c.b16 %v501, %v497
      %v598 = vpack.c.b16 %v502, %v498
      %v599 = vpack.c.b16 %v503, %v499
      %v600 = vpack.c.b16 %v508, %v504
      %v601 = vpack.c.b16 %v509, %v505
      %v602 = vpack.c.b16 %v510, %v506
      %v603 = vpack.c.b16 %v511, %v507
      %v604 = vpack.c.b16 %v516, %v512
      %v605 = vpack.c.b16 %v517, %v513
      %v606 = vpack.c.b16 %v518, %v514
      %v607 = vpack.c.b16 %v519, %v515
      %v608 = vpack.c.b16 %v524, %v520
      %v609 = vpack.c.b16 %v525, %v521
      %v610 = vpack.c.b16 %v526, %v522
      %v611 = vpack.c.b16 %v527, %v523
      %v612 = vpack.c.b16 %v532, %v528
      %v613 = vpack.c.b16 %v533, %v529
      %v614 = vpack.c.b16 %v534, %v530
      %v615 = vpack.c.b16 %v535, %v531
      %v616 = vpack.c.b16 %v540, %v536
      %v617 = vpack.c.b16 %v541, %v537
      %v618 = vpack.c.b16 %v542, %v538
      %v619 = vpack.c.b16 %v543, %v539
      %vm692 = vcmask 359424
      %v694 = vsel %vm692, %v308, 0
      %v697 = vsel %vm692, %v311, 0
      %vm699 = vcmask 1045504
      %v701 = vsel %vm699, %v616, 0
      %v704 = vsel %vm699, %v617, 0
      %v707 = vsel %vm699, %v618, 0
      %v710 = vsel %vm699, %v619, 0
      %712 = vmatprep.subr.bf16.mxu0 %v573
      %713 = vmatpush1.bf16.msra.mxu0 %v572
      %714 = vmatprep.subr.bf16.mxu0 %v569
      %715 = vmatpush1.bf16.msra.mxu0 %v568
      %716 = vmatprep.subr.bf16.mxu0 %v565
      %717 = vmatpush1.bf16.msra.mxu0 %v564
      %718 = vmatprep.subr.bf16.mxu0 %v561
      %719 = vmatpush1.bf16.msra.mxu0 %v560
      %720 = vmatprep.subr.bf16.mxu0 %v557
      %721 = vmatpush1.bf16.msra.mxu0 %v556
      %722 = vmatprep.subr.bf16.mxu0 %v553
      %723 = vmatpush1.bf16.msra.mxu0 %v552
      %724 = vmatprep.subr.bf16.mxu0 %v549
      %725 = vmatpush1.bf16.msra.mxu0 %v548
      %726 = vmatprep.subr.bf16.mxu0 %v545
      %727 = vmatpush1.bf16.msra.mxu0 %v544
      %728 = vmatprep.subr.bf16.mxu0 %v605
      %729 = vmatpush2.bf16.msra.mxu0 %v604
      %730 = vmatprep.subr.bf16.mxu0 %v601
      %731 = vmatpush2.bf16.msra.mxu0 %v600
      %732 = vmatprep.subr.bf16.mxu0 %v597
      %733 = vmatpush2.bf16.msra.mxu0 %v596
      %734 = vmatprep.subr.bf16.mxu0 %v593
      %735 = vmatpush2.bf16.msra.mxu0 %v592
      %736 = vmatprep.subr.bf16.mxu0 %v589
      %737 = vmatpush2.bf16.msra.mxu0 %v588
      %738 = vmatprep.subr.bf16.mxu0 %v585
      %739 = vmatpush2.bf16.msra.mxu0 %v584
      %740 = vmatprep.subr.bf16.mxu0 %v581
      %741 = vmatpush2.bf16.msra.mxu0 %v580
      %742 = vmatprep.subr.bf16.mxu0 %v577
      %743 = vmatpush2.bf16.msra.mxu0 %v576
      %744 = vmatprep.mubr.bf16.mxu0 %v307
      %745 = vmatmul.mubr.bf16.gmra.mxu0 %v306
      %v746 = vpop.f32.mrf.mxu0
      %v747 = vadd.f32 %v269, %v746
      %v748 = vpop.f32.mrf.mxu0
      %v749 = vadd.f32 %v273, %v748
      %v750 = vpop.f32.mrf.mxu0
      %v751 = vadd.f32 %v269, %v750
      %v752 = vpop.f32.mrf.mxu0
      %v753 = vadd.f32 %v273, %v752
      %754 = vmatprep.mubr.bf16.mxu0 %v310
      %755 = vmatmul.mubr.bf16.gmra.mxu0 %v309
      %v756 = vpop.f32.mrf.mxu0
      %v757 = vadd.f32 %v269, %v756
      %v758 = vpop.f32.mrf.mxu0
      %v759 = vadd.f32 %v273, %v758
      %v760 = vpop.f32.mrf.mxu0
      %v761 = vadd.f32 %v269, %v760
      %v762 = vpop.f32.mrf.mxu0
      %v763 = vadd.f32 %v273, %v762
      %764 = vdwg.mxu0
      %765 = vmatprep.subr.bf16.mxu0 0
      %766 = vmatpush1.bf16.msra.mxu0 0
      %767 = vmatprep.subr.bf16.mxu0 0
      %768 = vmatpush1.bf16.msra.mxu0 0
      %769 = vmatprep.subr.bf16.mxu0 0
      %770 = vmatpush1.bf16.msra.mxu0 0
      %771 = vmatprep.subr.bf16.mxu0 0
      %772 = vmatpush1.bf16.msra.mxu0 0
      %773 = vmatprep.subr.bf16.mxu0 0
      %774 = vmatpush1.bf16.msra.mxu0 0
      %775 = vmatprep.subr.bf16.mxu0 %v704
      %776 = vmatpush1.bf16.msra.mxu0 %v701
      %777 = vmatprep.subr.bf16.mxu0 %v613
      %778 = vmatpush1.bf16.msra.mxu0 %v612
      %779 = vmatprep.subr.bf16.mxu0 %v609
      %780 = vmatpush1.bf16.msra.mxu0 %v608
      %781 = vmatprep.subr.bf16.mxu0 0
      %782 = vmatpush2.bf16.msra.mxu0 0
      %783 = vmatprep.subr.bf16.mxu0 0
      %784 = vmatpush2.bf16.msra.mxu0 0
      %785 = vmatprep.subr.bf16.mxu0 0
      %786 = vmatpush2.bf16.msra.mxu0 0
      %787 = vmatprep.subr.bf16.mxu0 0
      %788 = vmatpush2.bf16.msra.mxu0 0
      %789 = vmatprep.subr.bf16.mxu0 0
      %790 = vmatpush2.bf16.msra.mxu0 0
      %791 = vmatprep.subr.bf16.mxu0 0
      %792 = vmatpush2.bf16.msra.mxu0 0
      %793 = vmatprep.subr.bf16.mxu0 0
      %794 = vmatpush2.bf16.msra.mxu0 0
      %795 = vmatprep.subr.bf16.mxu0 0
      %796 = vmatpush2.bf16.msra.mxu0 0
      %797 = vmatprep.mubr.bf16.mxu0 0
      %798 = vmatmul.mubr.bf16.gmra.mxu0 %v694
      %v799 = vpop.f32.mrf.mxu0
      %v800 = vadd.f32 %v747, %v799
      %v801 = vpop.f32.mrf.mxu0
      %v802 = vadd.f32 %v749, %v801
      %v803 = vpop.f32.mrf.mxu0
      %v804 = vadd.f32 %v751, %v803
      %v805 = vpop.f32.mrf.mxu0
      %v806 = vadd.f32 %v753, %v805
      %807 = vmatprep.mubr.bf16.mxu0 0
      %808 = vmatmul.mubr.bf16.gmra.mxu0 %v697
      %v809 = vpop.f32.mrf.mxu0
      %v810 = vadd.f32 %v757, %v809
      %v811 = vpop.f32.mrf.mxu0
      %v812 = vadd.f32 %v759, %v811
      %v813 = vpop.f32.mrf.mxu0
      %v814 = vadd.f32 %v761, %v813
      %v815 = vpop.f32.mrf.mxu0
      %v816 = vadd.f32 %v763, %v815
      %817 = vdwg.mxu0
      %818 = vmatprep.subr.bf16.mxu0 %v575
      %819 = vmatpush1.bf16.msra.mxu0 %v574
      %820 = vmatprep.subr.bf16.mxu0 %v571
      %821 = vmatpush1.bf16.msra.mxu0 %v570
      %822 = vmatprep.subr.bf16.mxu0 %v567
      %823 = vmatpush1.bf16.msra.mxu0 %v566
      %824 = vmatprep.subr.bf16.mxu0 %v563
      %825 = vmatpush1.bf16.msra.mxu0 %v562
      %826 = vmatprep.subr.bf16.mxu0 %v559
      %827 = vmatpush1.bf16.msra.mxu0 %v558
      %828 = vmatprep.subr.bf16.mxu0 %v555
      %829 = vmatpush1.bf16.msra.mxu0 %v554
      %830 = vmatprep.subr.bf16.mxu0 %v551
      %831 = vmatpush1.bf16.msra.mxu0 %v550
      %832 = vmatprep.subr.bf16.mxu0 %v547
      %833 = vmatpush1.bf16.msra.mxu0 %v546
      %834 = vmatprep.subr.bf16.mxu0 %v607
      %835 = vmatpush2.bf16.msra.mxu0 %v606
      %836 = vmatprep.subr.bf16.mxu0 %v603
      %837 = vmatpush2.bf16.msra.mxu0 %v602
      %838 = vmatprep.subr.bf16.mxu0 %v599
      %839 = vmatpush2.bf16.msra.mxu0 %v598
      %840 = vmatprep.subr.bf16.mxu0 %v595
      %841 = vmatpush2.bf16.msra.mxu0 %v594
      %842 = vmatprep.subr.bf16.mxu0 %v591
      %843 = vmatpush2.bf16.msra.mxu0 %v590
      %844 = vmatprep.subr.bf16.mxu0 %v587
      %845 = vmatpush2.bf16.msra.mxu0 %v586
      %846 = vmatprep.subr.bf16.mxu0 %v583
      %847 = vmatpush2.bf16.msra.mxu0 %v582
      %848 = vmatprep.subr.bf16.mxu0 %v579
      %849 = vmatpush2.bf16.msra.mxu0 %v578
      %850 = vmatprep.mubr.bf16.mxu0 %v307
      %851 = vmatmul.mubr.bf16.gmra.mxu0 %v306
      %v852 = vpop.f32.mrf.mxu0
      %v853 = vadd.f32 %v277, %v852
      %v854 = vpop.f32.mrf.mxu0
      %v855 = vadd.f32 %v281, %v854
      %v856 = vpop.f32.mrf.mxu0
      %v857 = vadd.f32 %v277, %v856
      %v858 = vpop.f32.mrf.mxu0
      %v859 = vadd.f32 %v281, %v858
      %860 = vmatprep.mubr.bf16.mxu0 %v310
      %861 = vmatmul.mubr.bf16.gmra.mxu0 %v309
      %v862 = vpop.f32.mrf.mxu0
      %v863 = vadd.f32 %v277, %v862
      %v864 = vpop.f32.mrf.mxu0
      %v865 = vadd.f32 %v281, %v864
      %v866 = vpop.f32.mrf.mxu0
      %v867 = vadd.f32 %v277, %v866
      %v868 = vpop.f32.mrf.mxu0
      %v869 = vadd.f32 %v281, %v868
      %870 = vdwg.mxu0
      %871 = vmatprep.subr.bf16.mxu0 0
      %872 = vmatpush1.bf16.msra.mxu0 0
      %873 = vmatprep.subr.bf16.mxu0 0
      %874 = vmatpush1.bf16.msra.mxu0 0
      %875 = vmatprep.subr.bf16.mxu0 0
      %876 = vmatpush1.bf16.msra.mxu0 0
      %877 = vmatprep.subr.bf16.mxu0 0
      %878 = vmatpush1.bf16.msra.mxu0 0
      %879 = vmatprep.subr.bf16.mxu0 0
      %880 = vmatpush1.bf16.msra.mxu0 0
      %881 = vmatprep.subr.bf16.mxu0 %v710
      %882 = vmatpush1.bf16.msra.mxu0 %v707
      %883 = vmatprep.subr.bf16.mxu0 %v615
      %884 = vmatpush1.bf16.msra.mxu0 %v614
      %885 = vmatprep.subr.bf16.mxu0 %v611
      %886 = vmatpush1.bf16.msra.mxu0 %v610
      %887 = vmatprep.subr.bf16.mxu0 0
      %888 = vmatpush2.bf16.msra.mxu0 0
      %889 = vmatprep.subr.bf16.mxu0 0
      %890 = vmatpush2.bf16.msra.mxu0 0
      %891 = vmatprep.subr.bf16.mxu0 0
      %892 = vmatpush2.bf16.msra.mxu0 0
      %893 = vmatprep.subr.bf16.mxu0 0
      %894 = vmatpush2.bf16.msra.mxu0 0
      %895 = vmatprep.subr.bf16.mxu0 0
      %896 = vmatpush2.bf16.msra.mxu0 0
      %897 = vmatprep.subr.bf16.mxu0 0
      %898 = vmatpush2.bf16.msra.mxu0 0
      %899 = vmatprep.subr.bf16.mxu0 0
      %900 = vmatpush2.bf16.msra.mxu0 0
      %901 = vmatprep.subr.bf16.mxu0 0
      %902 = vmatpush2.bf16.msra.mxu0 0
      %903 = vmatprep.mubr.bf16.mxu0 0
      %904 = vmatmul.mubr.bf16.gmra.mxu0 %v694
      %v905 = vpop.f32.mrf.mxu0
      %v906 = vadd.f32 %v853, %v905
      %v907 = vpop.f32.mrf.mxu0
      %v908 = vadd.f32 %v855, %v907
      %v909 = vpop.f32.mrf.mxu0
      %v910 = vadd.f32 %v857, %v909
      %v911 = vpop.f32.mrf.mxu0
      %v912 = vadd.f32 %v859, %v911
      %913 = vmatprep.mubr.bf16.mxu0 0
      %914 = vmatmul.mubr.bf16.gmra.mxu0 %v697
      %v915 = vpop.f32.mrf.mxu0
      %v916 = vadd.f32 %v863, %v915
      %v917 = vpop.f32.mrf.mxu0
      %v918 = vadd.f32 %v865, %v917
      %v919 = vpop.f32.mrf.mxu0
      %v920 = vadd.f32 %v867, %v919
      %v921 = vpop.f32.mrf.mxu0
      %v922 = vadd.f32 %v869, %v921
      %923 = vdwg.mxu0
      %v924 = vtanh.pop %v800
      %v925 = vtanh.pop %v802
      %v926 = vtanh.pop %v906
      %v927 = vtanh.pop %v908
      %v928 = vtanh.pop %v804
      %v929 = vtanh.pop %v806
      %v930 = vtanh.pop %v910
      %v931 = vtanh.pop %v912
      %v932 = vtanh.pop %v810
      %v933 = vtanh.pop %v812
      %v934 = vtanh.pop %v916
      %v935 = vtanh.pop %v918
      %v936 = vtanh.pop %v814
      %v937 = vtanh.pop %v816
      %v938 = vtanh.pop %v920
      %v939 = vtanh.pop %v922
      %v940 = vand.u32 2147483647, %v924
      %v941 = vand.u32 2147483647, %v925
      %v942 = vand.u32 2147483647, %v926
      %v943 = vand.u32 2147483647, %v927
      %v944 = vand.u32 2147483647, %v928
      %v945 = vand.u32 2147483647, %v929
      %v946 = vand.u32 2147483647, %v930
      %v947 = vand.u32 2147483647, %v931
      %v948 = vand.u32 2147483647, %v932
      %v949 = vand.u32 2147483647, %v933
      %v950 = vand.u32 2147483647, %v934
      %v951 = vand.u32 2147483647, %v935
      %v952 = vand.u32 2147483647, %v936
      %v953 = vand.u32 2147483647, %v937
      %v954 = vand.u32 2147483647, %v938
      %v955 = vand.u32 2147483647, %v939
      %956 = vst [vmem:[%s177] sm:$0xff] %v940
      %957 = vst [vmem:[%s177 + $0x8] sm:$0xff] %v941
      %958 = vst [vmem:[%s177 + $0x10] sm:$0xff] %v942
      %959 = vst [vmem:[%s177 + $0x18] sm:$0xff] %v943
      %960 = vst [vmem:[%s177 + $0x20] sm:$0xff] %v944
      %961 = vst [vmem:[%s177 + $0x28] sm:$0xff] %v945
      %962 = vst [vmem:[%s177 + $0x30] sm:$0xff] %v946
      %963 = vst [vmem:[%s177 + $0x38] sm:$0xff] %v947
      %964 = vst [vmem:[%s177 + $0x40] sm:$0xff] %v948
      %965 = vst [vmem:[%s177 + $0x48] sm:$0xff] %v949
      %966 = vst [vmem:[%s177 + $0x50] sm:$0xff] %v950
      %967 = vst [vmem:[%s177 + $0x58] sm:$0xff] %v951
      %968 = vst [vmem:[%s177 + $0x60] sm:$0xff] %v952
      %969 = vst [vmem:[%s177 + $0x68] sm:$0xff] %v953
      %970 = vst [vmem:[%s177 + $0x70] sm:$0xff] %v954
      %971 = vst [vmem:[%s177 + $0x78] sm:$0xff] %v955
      %s972 = smul.u32 4, %s14
      %p973 = scmp.lt.s32.totalorder %s972, 15
      %s974 = scalar_select %p973, %s972, 15
      %s975 = smul.addr %s974, 4
      %s976 = smul.addr %s975, 8
      %s977 = scalar_lea.vmem %s3, %s976
      // Predicated region
      $region33: #{conv_tanh_abs_nhwc.1} parent=31 // pred_check
        %p978 = pneg %p100
      $region34: #{conv_tanh_abs_nhwc.1} parent=31 // pred_check_branch
        %980 = sbr.rel (%p978) target = $region36
      $region35: #{conv_tanh_abs_nhwc.1} parent=31 // pred_region
        %s981 = smul.u32 4, %s14
      $region36: #{conv_tanh_abs_nhwc.1} parent=31 // pred_fallthru
        _
    $region32: #{conv_tanh_abs_nhwc.1} parent=5 // pred_fallthru
      _
    %p982 = scmp.le.s32.totalorder 2, %s9
    // Predicated region
    $region37: #{conv_tanh_abs_nhwc.1} parent=5 // pred_check
      %p983 = pneg %p982
    $region38: #{conv_tanh_abs_nhwc.1} parent=5 // pred_check_branch
      %985 = sbr.rel (%p983) target = $region40
    $region39: #{conv_tanh_abs_nhwc.1} parent=5 // pred_region
      %s986 = ssub.s32 %s9, 2
      // Predicated region
      $region41: #{conv_tanh_abs_nhwc.1} parent=39 // pred_check
        %p987 = pneg %p106
      $region42: #{conv_tanh_abs_nhwc.1} parent=39 // pred_check_branch
        %989 = sbr.rel (%p987) target = $region44
      $region43: #{conv_tanh_abs_nhwc.1} parent=39 // pred_region
        %s990 = smul.u32 4, %s15
        %p991 = scmp.lt.s32.totalorder %s990, 15
        %s992 = scalar_select %p991, %s990, 15
        %s993 = smul.addr %s992, 4
        %s994 = smul.addr %s993, 8
        %s995 = scalar_lea.vmem %s3, %s994
      $region44: #{conv_tanh_abs_nhwc.1} parent=39 // pred_fallthru
        _
    $region40: #{conv_tanh_abs_nhwc.1} parent=5 // pred_fallthru
      _
  $region6: #{conv_tanh_abs_nhwc.1} parent=0 // loop_footer
    %s13 = sadd.s32 1, %s9
  $region7: #{conv_tanh_abs_nhwc.1} parent=0 // loop_footer_branch
    %8 = sbr.rel target = $region3
  $region8: #{conv_tanh_abs_nhwc.1} parent=0 // loop_exit
    _

</llo_original>
